<compile_context>
chip_gen: v6e
topology: v6e:2x2x1
jax: 0.10.0
libtpu: 0.0.40
codegen_flags: <defaults>
</compile_context>

<pallas_src>
import functools

import jax
import jax.numpy as jnp
from jax.experimental import pallas as pl
from jax.experimental.pallas import tpu as pltpu

INPUT_DIM = 784
HIDDEN_DIM = 256
LATENT_DIM = 20
LATENT_PAD = 128   # lane-dense packed head width (mu: 0..19, log_var: 20..39)


def _round_up(x, m):
    return ((x + m - 1) // m) * m


def encoder_kernel(x_ref, w1_ref, b1_ref, w23_ref, b23_ref, out_ref):
    # fc1: bf16 x bf16 -> f32 accumulate on the MXU.
    h = jnp.dot(x_ref[...], w1_ref[...], preferred_element_type=jnp.float32)
    # Bias + ReLU in f32 (v5e-friendly elementwise path).
    h = jnp.maximum(h + b1_ref[...], 0.0)

    # packed fc2/fc3 -> [mu | log_var | zeros]; cast h to bf16 only for the dot.
    out = jnp.dot(h.astype(jnp.bfloat16), w23_ref[...],
                  preferred_element_type=jnp.float32)
    out_ref[...] = out + b23_ref[...]


def prepare_params(w1, b1, w2, b2, w3, b3):
    """One-time packing (hoisted out of the forward pass):
    - w1 cast to bf16, b1 reshaped to [1, HIDDEN_DIM] (f32)
    - (w2, b2) / (w3, b3) packed side-by-side into a single lane-dense
      [HIDDEN_DIM, 128] bf16 weight and [1, 128] f32 bias (padded cols zero)."""
    w23 = jnp.zeros((HIDDEN_DIM, LATENT_PAD), jnp.float32)
    w23 = w23.at[:, :LATENT_DIM].set(w2)
    w23 = w23.at[:, LATENT_DIM:2 * LATENT_DIM].set(w3)
    b23 = jnp.zeros((1, LATENT_PAD), jnp.float32)
    b23 = b23.at[:, :LATENT_DIM].set(b2)
    b23 = b23.at[:, LATENT_DIM:2 * LATENT_DIM].set(b3)
    return (w1.astype(jnp.bfloat16),
            b1[None, :].astype(jnp.float32),
            w23.astype(jnp.bfloat16),
            b23)


@functools.partial(jax.jit, static_argnames=("block_b",))
def encoder_forward(x, w1, b1r, w23, b23, block_b=512):
    """x: [B, INPUT_DIM] f32 -> (mu [B, LATENT_DIM], log_var [B, LATENT_DIM])."""
    B = x.shape[0]

    # Balanced batch tiling: spread B evenly over the number of steps instead
    # of padding the tail tile all the way up to block_b.
    num_steps = int(pl.cdiv(B, block_b))
    if B >= 16:
        num_steps = max(num_steps, 2)   # v7x: let both TensorCores split the batch
    TB = _round_up(int(pl.cdiv(B, num_steps)), 8)
    Bp = num_steps * TB

    xb = x.astype(jnp.bfloat16)
    if Bp != B:
        xb = jnp.pad(xb, ((0, Bp - B), (0, 0)))

    cost = pl.CostEstimate(
        flops=2 * Bp * (INPUT_DIM * HIDDEN_DIM + HIDDEN_DIM * LATENT_PAD),
        transcendentals=0,
        bytes_accessed=(2 * Bp * INPUT_DIM                 # x  (bf16)
                        + 2 * INPUT_DIM * HIDDEN_DIM       # w1 (bf16)
                        + 2 * HIDDEN_DIM * LATENT_PAD      # w23 (bf16)
                        + 4 * (HIDDEN_DIM + LATENT_PAD)    # biases (f32)
                        + 4 * Bp * LATENT_PAD),            # out (f32)
    )

    out = pl.pallas_call(
        encoder_kernel,
        out_shape=jax.ShapeDtypeStruct((Bp, LATENT_PAD), jnp.float32),
        grid=(num_steps,),
        in_specs=[
            # batch-tiled activations (double-buffered across grid steps)
            pl.BlockSpec((TB, INPUT_DIM), lambda i: (i, 0)),
            # weights / biases: constant index_map -> resident in VMEM
            pl.BlockSpec((INPUT_DIM, HIDDEN_DIM), lambda i: (0, 0)),
            pl.BlockSpec((1, HIDDEN_DIM), lambda i: (0, 0)),
            pl.BlockSpec((HIDDEN_DIM, LATENT_PAD), lambda i: (0, 0)),
            pl.BlockSpec((1, LATENT_PAD), lambda i: (0, 0)),
        ],
        out_specs=pl.BlockSpec((TB, LATENT_PAD), lambda i: (i, 0)),
        compiler_params=pltpu.CompilerParams(
            dimension_semantics=("parallel",),   # shard batch over TCs (v7x)
            vmem_limit_bytes=32 << 20,           # safe on v5e/v6e/v7x
        ),
        cost_estimate=cost,
    )(xb, w1, b1r, w23, b23)

    mu = out[:B, :LATENT_DIM]
    log_var = out[:B, LATENT_DIM:2 * LATENT_DIM]
    return mu, log_var


def init_params(key):
    """Deterministic init mimicking nn.Linear (uniform +-1/sqrt(fan_in)).

    Weights are stored as [in_features, out_features] (already transposed
    relative to PyTorch's [out, in])."""
    k1, k2, k3, k4, k5, k6 = jax.random.split(key, 6)

    def lin(kw, kb, fan_in, fan_out):
        bound = 1.0 / jnp.sqrt(fan_in)
        w = jax.random.uniform(kw, (fan_in, fan_out), jnp.float32, -bound, bound)
        b = jax.random.uniform(kb, (fan_out,), jnp.float32, -bound, bound)
        return w, b

    w1, b1 = lin(k1, k2, INPUT_DIM, HIDDEN_DIM)
    w2, b2 = lin(k3, k4, HIDDEN_DIM, LATENT_DIM)
    w3, b3 = lin(k5, k6, HIDDEN_DIM, LATENT_DIM)
    return w1, b1, w2, b2, w3, b3


def reference_forward(x, w1, b1, w2, b2, w3, b3):
    h = jnp.maximum(x @ w1 + b1, 0.0)
    return h @ w2 + b2, h @ w3 + b3


if __name__ == "__main__":
    key = jax.random.PRNGKey(0)
    kx, kp = jax.random.split(key)

    # bf16 MXU inputs vs f32 reference over K=784 -> compare at bf16 tolerance.
    TOL = 3e-2

    batch = 8
    x = jax.random.normal(kx, (batch, INPUT_DIM), jnp.float32)
    raw_params = init_params(kp)
    packed_params = prepare_params(*raw_params)   # one-time weight packing/cast

    mu, log_var = encoder_forward(x, *packed_params)
    jax.block_until_ready((mu, log_var))

    mu_ref, lv_ref = reference_forward(x, *raw_params)
    assert mu.shape == (batch, LATENT_DIM) and log_var.shape == (batch, LATENT_DIM)
    assert mu.dtype == jnp.float32 and log_var.dtype == jnp.float32
    assert jnp.allclose(mu, mu_ref, atol=TOL, rtol=TOL)
    assert jnp.allclose(log_var, lv_ref, atol=TOL, rtol=TOL)

    # Also exercise a batch that needs padding and spans multiple grid steps
    # (balanced tiling: 300 rows -> 2 steps of 152, padded to 304).
    batch2 = 300
    x2 = jax.random.normal(kx, (batch2, INPUT_DIM), jnp.float32)
    mu2, lv2 = encoder_forward(x2, *packed_params)
    jax.block_until_ready((mu2, lv2))
    mu2_ref, lv2_ref = reference_forward(x2, *raw_params)
    assert mu2.shape == (batch2, LATENT_DIM) and lv2.shape == (batch2, LATENT_DIM)
    assert jnp.allclose(mu2, mu2_ref, atol=TOL, rtol=TOL)
    assert jnp.allclose(lv2, lv2_ref, atol=TOL, rtol=TOL)

    print("KERNEL_OK")
</pallas_src>

<mosaic_0001>
module attributes {stable_mosaic.version = 11 : i64} {
  func.func @encoder_kernel(%arg0: i32, %arg1: memref<8x784xbf16, #tpu.memory_space<vmem>>, %arg2: memref<784x256xbf16, #tpu.memory_space<vmem>>, %arg3: memref<1x256xf32, #tpu.memory_space<vmem>>, %arg4: memref<256x128xbf16, #tpu.memory_space<vmem>>, %arg5: memref<1x128xf32, #tpu.memory_space<vmem>>, %arg6: memref<8x128xf32, #tpu.memory_space<vmem>>) attributes {dimension_semantics = [#tpu.dimension_semantics<parallel>], iteration_bounds = array<i64: 1>, scalar_prefetch = 0 : i64, scratch_operands = 0 : i64, tpu.core_type = #tpu.core_type<tc>, window_params = [{transform_indices = @transform_0, window_bounds = array<i64: 8, 784>}, {pipeline_mode = #tpu.pipeline_mode<synchronous>, transform_indices = @transform_1, window_bounds = array<i64: 784, 256>}, {pipeline_mode = #tpu.pipeline_mode<synchronous>, transform_indices = @transform_2, window_bounds = array<i64: 1, 256>}, {pipeline_mode = #tpu.pipeline_mode<synchronous>, transform_indices = @transform_3, window_bounds = array<i64: 256, 128>}, {pipeline_mode = #tpu.pipeline_mode<synchronous>, transform_indices = @transform_4, window_bounds = array<i64: 1, 128>}, {transform_indices = @transform_5, window_bounds = array<i64: 8, 128>}]} {
    %c0 = arith.constant 0 : index
    %c0_0 = arith.constant 0 : index
    %0 = vector.load %arg1[%c0, %c0_0] : memref<8x784xbf16, #tpu.memory_space<vmem>>, vector<8x784xbf16>
    %c0_1 = arith.constant 0 : index
    %c0_2 = arith.constant 0 : index
    %1 = vector.load %arg2[%c0_1, %c0_2] : memref<784x256xbf16, #tpu.memory_space<vmem>>, vector<784x256xbf16>
    %cst = arith.constant dense<0.000000e+00> : vector<8x256xf32>
    %2 = tpu.matmul %0, %1, %cst {dimension_numbers = #tpu.dot_dimension_numbers<[1], [0], [0], [1], [0, 0, 1, 1], [], []>} : vector<8x784xbf16>, vector<784x256xbf16>, vector<8x256xf32> -> vector<8x256xf32>
    %c0_3 = arith.constant 0 : index
    %c0_4 = arith.constant 0 : index
    %3 = vector.load %arg3[%c0_3, %c0_4] : memref<1x256xf32, #tpu.memory_space<vmem>>, vector<1x256xf32>
    %4 = vector.broadcast %3 : vector<1x256xf32> to vector<8x256xf32>
    %5 = arith.addf %2, %4 : vector<8x256xf32>
    %cst_5 = arith.constant 0.000000e+00 : f32
    %6 = vector.broadcast %cst_5 : f32 to vector<8x256xf32>
    %7 = arith.maximumf %5, %6 : vector<8x256xf32>
    %8 = arith.truncf %7 : vector<8x256xf32> to vector<8x256xbf16>
    %c0_6 = arith.constant 0 : index
    %c0_7 = arith.constant 0 : index
    %9 = vector.load %arg4[%c0_6, %c0_7] : memref<256x128xbf16, #tpu.memory_space<vmem>>, vector<256x128xbf16>
    %cst_8 = arith.constant dense<0.000000e+00> : vector<8x128xf32>
    %10 = tpu.matmul %8, %9, %cst_8 {dimension_numbers = #tpu.dot_dimension_numbers<[1], [0], [0], [1], [0, 0, 1, 1], [], []>} : vector<8x256xbf16>, vector<256x128xbf16>, vector<8x128xf32> -> vector<8x128xf32>
    %c0_9 = arith.constant 0 : index
    %c0_10 = arith.constant 0 : index
    %11 = vector.load %arg5[%c0_9, %c0_10] : memref<1x128xf32, #tpu.memory_space<vmem>>, vector<1x128xf32>
    %12 = vector.broadcast %11 : vector<1x128xf32> to vector<8x128xf32>
    %13 = arith.addf %10, %12 : vector<8x128xf32>
    %c0_11 = arith.constant 0 : index
    %c0_12 = arith.constant 0 : index
    %14 = vector.load %arg6[%c0_11, %c0_12] : memref<8x128xf32, #tpu.memory_space<vmem>>, vector<8x128xf32>
    tpu.vector_store %arg6[%c0_11, %c0_12], %13 {strides = array<i32>} : memref<8x128xf32, #tpu.memory_space<vmem>>, vector<8x128xf32>,
    return
  }
  func.func @transform_0(%arg0: i32) -> (i32, i32) {
    %c0_i32 = arith.constant 0 : i32
    %c0_i32_0 = arith.constant 0 : i32
    return %arg0, %c0_i32 : i32, i32
  }
  func.func @transform_1(%arg0: i32) -> (i32, i32) {
    %c0_i32 = arith.constant 0 : i32
    %c0_i32_0 = arith.constant 0 : i32
    %c0_i32_1 = arith.constant 0 : i32
    return %c0_i32, %c0_i32_0 : i32, i32
  }
  func.func @transform_2(%arg0: i32) -> (i32, i32) {
    %c0_i32 = arith.constant 0 : i32
    %c0_i32_0 = arith.constant 0 : i32
    %c0_i32_1 = arith.constant 0 : i32
    return %c0_i32, %c0_i32_0 : i32, i32
  }
  func.func @transform_3(%arg0: i32) -> (i32, i32) {
    %c0_i32 = arith.constant 0 : i32
    %c0_i32_0 = arith.constant 0 : i32
    %c0_i32_1 = arith.constant 0 : i32
    return %c0_i32, %c0_i32_0 : i32, i32
  }
  func.func @transform_4(%arg0: i32) -> (i32, i32) {
    %c0_i32 = arith.constant 0 : i32
    %c0_i32_0 = arith.constant 0 : i32
    %c0_i32_1 = arith.constant 0 : i32
    return %c0_i32, %c0_i32_0 : i32, i32
  }
  func.func @transform_5(%arg0: i32) -> (i32, i32) {
    %c0_i32 = arith.constant 0 : i32
    %c0_i32_0 = arith.constant 0 : i32
    return %arg0, %c0_i32 : i32, i32
  }
}

</mosaic_0001>

<llo_original>
// kernel: encoder_forward.1
$region0: #{encoder_forward.1}
  #allocation0 [shape = 'u32[]', space=smem, size = 0x4, offset = 0x4, fixed_abs, tag = 'smem constant byte address 0x4 - core index']
  #allocation1 [shape = 'u32[144,128]{1,0:T(1,128)}', space=vmem, size = 0x12000, scoped, tag = 'internal scratch']
  %s0 = inlined_call_operand.vmem [shape: bf16[8,784], index: 0, kind: input, shape index: {}]
  %s1 = inlined_call_operand.hbm [shape: bf16[784,256], index: 1, kind: input, shape index: {}]
  %s2 = inlined_call_operand.vmem [shape: f32[1,256], index: 2, kind: input, shape index: {}]
  %s3 = inlined_call_operand.hbm [shape: bf16[256,128], index: 3, kind: input, shape index: {}]
  %s4 = inlined_call_operand.vmem [shape: f32[1,128], index: 4, kind: input, shape index: {}]
  %s5 = inlined_call_operand.vmem [shape: f32[8,128], index: 5, kind: output, shape index: {}]
  %s6 = sld [smem:[#allocation0]]
  $region38: #{encoder_forward.1} parent=0
    _
  %s8 = ssub.s32 1, %s6
  %s9 = scalar_select 0, %s8, %s6
  $region1: #{encoder_forward.1} parent=0
    #allocation2 [shape = 'u8[401408]{0}', space=vmem, size = 0x62000, scoped, tag = 'input window, operand 1, single buffered']
    #allocation3 [shape = 's32[1]{0}', space=sflag, size = 0x4, scoped, tag = 'scoped memory for encoder_forward.1']
    #allocation4 [shape = 'u8[65536]{0}', space=vmem, size = 0x10000, scoped, tag = 'input window, operand 3, single buffered']
    #allocation5 [shape = 's32[1]{0}', space=sflag, size = 0x4, scoped, tag = 'scoped memory for encoder_forward.1']
    %10 = vsyncpa [#allocation3], 0
    %11 = vsyncpa [#allocation5], 0
    // Predicated region
    $region2: #{encoder_forward.1} parent=1 // pred_check
      _
    $region3: #{encoder_forward.1} parent=1 // pred_check_branch
      %13 = sbr.rel (0) target = $region5
    $region4: #{encoder_forward.1} parent=1 // pred_region
      _
    $region5: #{encoder_forward.1} parent=1 // pred_fallthru
      _
    // Predicated region
    $region6: #{encoder_forward.1} parent=1 // pred_check
      _
    $region7: #{encoder_forward.1} parent=1 // pred_check_branch
      %15 = sbr.rel (0) target = $region9
    $region8: #{encoder_forward.1} parent=1 // pred_region
      %s17 = ssub.s32 12544, 12544
      %18 = vsyncadd [#allocation3], %s17
      %s19 = sshll.u32 [#allocation2], 4
      %s20 = int_to_ptr.vmem [resolvable:$true] %s19
      %25 = dma.hbm_to_vmem [thread:$0]  %s1, 12544, %s20, [#allocation3], 128, 128, 8
    $region9: #{encoder_forward.1} parent=1 // pred_fallthru
      _
    // Predicated region
    $region10: #{encoder_forward.1} parent=1 // pred_check
      _
    $region11: #{encoder_forward.1} parent=1 // pred_check_branch
      %27 = sbr.rel (0) target = $region13
    $region12: #{encoder_forward.1} parent=1 // pred_region
      _
    $region13: #{encoder_forward.1} parent=1 // pred_fallthru
      _
    // Predicated region
    $region14: #{encoder_forward.1} parent=1 // pred_check
      _
    $region15: #{encoder_forward.1} parent=1 // pred_check_branch
      %29 = sbr.rel (0) target = $region17
    $region16: #{encoder_forward.1} parent=1 // pred_region
      %s31 = ssub.s32 2048, 2048
      %32 = vsyncadd [#allocation5], %s31
      %s33 = sshll.u32 [#allocation4], 4
      %s34 = int_to_ptr.vmem [resolvable:$true] %s33
      %39 = dma.hbm_to_vmem [thread:$0]  %s3, 2048, %s34, [#allocation5], 64, 64, 4
    $region17: #{encoder_forward.1} parent=1 // pred_fallthru
      _
    // Predicated region
    $region18: #{encoder_forward.1} parent=1 // pred_check
      _
    $region19: #{encoder_forward.1} parent=1 // pred_check_branch
      %41 = sbr.rel (0) target = $region21
    $region20: #{encoder_forward.1} parent=1 // pred_region
      _
    $region21: #{encoder_forward.1} parent=1 // pred_fallthru
      _
    // Predicated region
    $region22: #{encoder_forward.1} parent=1 // pred_check
      _
    $region23: #{encoder_forward.1} parent=1 // pred_check_branch
      %43 = sbr.rel (0) target = $region25
    $region24: #{encoder_forward.1} parent=1 // pred_region
      %44 = dma.done [#allocation3], 12544
    $region25: #{encoder_forward.1} parent=1 // pred_fallthru
      _
    // Predicated region
    $region26: #{encoder_forward.1} parent=1 // pred_check
      _
    $region27: #{encoder_forward.1} parent=1 // pred_check_branch
      %46 = sbr.rel (0) target = $region29
    $region28: #{encoder_forward.1} parent=1 // pred_region
      %47 = dma.done [#allocation5], 2048
    $region29: #{encoder_forward.1} parent=1 // pred_fallthru
      _
    %v49 = vld [vmem:[%s0] sm:$0xff]
    %v50 = vld [vmem:[%s0 + $0x8] sm:$0xff]
    %v51 = vld [vmem:[%s0 + $0x10] sm:$0xff]
    %v52 = vld [vmem:[%s0 + $0x18] sm:$0xf]
    %v53 = vld [vmem:[#allocation2] sm:$0xff]
    %v54 = vld [vmem:[#allocation2 + $0x8] sm:$0xff]
    %v55 = vld [vmem:[#allocation2 + $0x10] sm:$0xff]
    %v56 = vld [vmem:[#allocation2 + $0x18] sm:$0xff]
    %v57 = vld [vmem:[#allocation2 + $0x20] sm:$0xff]
    %v58 = vld [vmem:[#allocation2 + $0x28] sm:$0xff]
    %v59 = vld [vmem:[#allocation2 + $0x30] sm:$0xff]
    %v60 = vld [vmem:[#allocation2 + $0x38] sm:$0xff]
    %v61 = vld [vmem:[#allocation2 + $0x40] sm:$0xff]
    %v62 = vld [vmem:[#allocation2 + $0x48] sm:$0xff]
    %v63 = vld [vmem:[#allocation2 + $0x50] sm:$0xff]
    %v64 = vld [vmem:[#allocation2 + $0x58] sm:$0xff]
    %v65 = vld [vmem:[#allocation2 + $0x60] sm:$0xff]
    %v66 = vld [vmem:[#allocation2 + $0x68] sm:$0xff]
    %v67 = vld [vmem:[#allocation2 + $0x70] sm:$0xff]
    %v68 = vld [vmem:[#allocation2 + $0x78] sm:$0xff]
    %v69 = vld [vmem:[#allocation2 + $0x80] sm:$0xff]
    %v70 = vld [vmem:[#allocation2 + $0x88] sm:$0xff]
    %v71 = vld [vmem:[#allocation2 + $0x90] sm:$0xff]
    %v72 = vld [vmem:[#allocation2 + $0x98] sm:$0xff]
    %v73 = vld [vmem:[#allocation2 + $0xa0] sm:$0xff]
    %v74 = vld [vmem:[#allocation2 + $0xa8] sm:$0xff]
    %v75 = vld [vmem:[#allocation2 + $0xb0] sm:$0xff]
    %v76 = vld [vmem:[#allocation2 + $0xb8] sm:$0xff]
    %v77 = vld [vmem:[#allocation2 + $0xc0] sm:$0xff]
    %v78 = vld [vmem:[#allocation2 + $0xc8] sm:$0xff]
    %v79 = vld [vmem:[#allocation2 + $0xd0] sm:$0xff]
    %v80 = vld [vmem:[#allocation2 + $0xd8] sm:$0xff]
    %v81 = vld [vmem:[#allocation2 + $0xe0] sm:$0xff]
    %v82 = vld [vmem:[#allocation2 + $0xe8] sm:$0xff]
    %v83 = vld [vmem:[#allocation2 + $0xf0] sm:$0xff]
    %v84 = vld [vmem:[#allocation2 + $0xf8] sm:$0xff]
    %v85 = vld [vmem:[#allocation2 + $0x100] sm:$0xff]
    %v86 = vld [vmem:[#allocation2 + $0x108] sm:$0xff]
    %v87 = vld [vmem:[#allocation2 + $0x110] sm:$0xff]
    %v88 = vld [vmem:[#allocation2 + $0x118] sm:$0xff]
    %v89 = vld [vmem:[#allocation2 + $0x120] sm:$0xff]
    %v90 = vld [vmem:[#allocation2 + $0x128] sm:$0xff]
    %v91 = vld [vmem:[#allocation2 + $0x130] sm:$0xff]
    %v92 = vld [vmem:[#allocation2 + $0x138] sm:$0xff]
    %v93 = vld [vmem:[#allocation2 + $0x140] sm:$0xff]
    %v94 = vld [vmem:[#allocation2 + $0x148] sm:$0xff]
    %v95 = vld [vmem:[#allocation2 + $0x150] sm:$0xff]
    %v96 = vld [vmem:[#allocation2 + $0x158] sm:$0xff]
    %v97 = vld [vmem:[#allocation2 + $0x160] sm:$0xff]
    %v98 = vld [vmem:[#allocation2 + $0x168] sm:$0xff]
    %v99 = vld [vmem:[#allocation2 + $0x170] sm:$0xff]
    %v100 = vld [vmem:[#allocation2 + $0x178] sm:$0xff]
    %v101 = vld [vmem:[#allocation2 + $0x180] sm:$0xff]
    %v102 = vld [vmem:[#allocation2 + $0x188] sm:$0xff]
    %v103 = vld [vmem:[#allocation2 + $0x190] sm:$0xff]
    %v104 = vld [vmem:[#allocation2 + $0x198] sm:$0xff]
    %v105 = vld [vmem:[#allocation2 + $0x1a0] sm:$0xff]
    %v106 = vld [vmem:[#allocation2 + $0x1a8] sm:$0xff]
    %v107 = vld [vmem:[#allocation2 + $0x1b0] sm:$0xff]
    %v108 = vld [vmem:[#allocation2 + $0x1b8] sm:$0xff]
    %v109 = vld [vmem:[#allocation2 + $0x1c0] sm:$0xff]
    %v110 = vld [vmem:[#allocation2 + $0x1c8] sm:$0xff]
    %v111 = vld [vmem:[#allocation2 + $0x1d0] sm:$0xff]
    %v112 = vld [vmem:[#allocation2 + $0x1d8] sm:$0xff]
    %v113 = vld [vmem:[#allocation2 + $0x1e0] sm:$0xff]
    %v114 = vld [vmem:[#allocation2 + $0x1e8] sm:$0xff]
    %v115 = vld [vmem:[#allocation2 + $0x1f0] sm:$0xff]
    %v116 = vld [vmem:[#allocation2 + $0x1f8] sm:$0xff]
    %v117 = vld [vmem:[#allocation2 + $0x200] sm:$0xff]
    %v118 = vld [vmem:[#allocation2 + $0x208] sm:$0xff]
    %v119 = vld [vmem:[#allocation2 + $0x210] sm:$0xff]
    %v120 = vld [vmem:[#allocation2 + $0x218] sm:$0xff]
    %v121 = vld [vmem:[#allocation2 + $0x220] sm:$0xff]
    %v122 = vld [vmem:[#allocation2 + $0x228] sm:$0xff]
    %v123 = vld [vmem:[#allocation2 + $0x230] sm:$0xff]
    %v124 = vld [vmem:[#allocation2 + $0x238] sm:$0xff]
    %v125 = vld [vmem:[#allocation2 + $0x240] sm:$0xff]
    %v126 = vld [vmem:[#allocation2 + $0x248] sm:$0xff]
    %v127 = vld [vmem:[#allocation2 + $0x250] sm:$0xff]
    %v128 = vld [vmem:[#allocation2 + $0x258] sm:$0xff]
    %v129 = vld [vmem:[#allocation2 + $0x260] sm:$0xff]
    %v130 = vld [vmem:[#allocation2 + $0x268] sm:$0xff]
    %v131 = vld [vmem:[#allocation2 + $0x270] sm:$0xff]
    %v132 = vld [vmem:[#allocation2 + $0x278] sm:$0xff]
    %v133 = vld [vmem:[#allocation2 + $0x280] sm:$0xff]
    %v134 = vld [vmem:[#allocation2 + $0x288] sm:$0xff]
    %v135 = vld [vmem:[#allocation2 + $0x290] sm:$0xff]
    %v136 = vld [vmem:[#allocation2 + $0x298] sm:$0xff]
    %v137 = vld [vmem:[#allocation2 + $0x2a0] sm:$0xff]
    %v138 = vld [vmem:[#allocation2 + $0x2a8] sm:$0xff]
    %v139 = vld [vmem:[#allocation2 + $0x2b0] sm:$0xff]
    %v140 = vld [vmem:[#allocation2 + $0x2b8] sm:$0xff]
    %v141 = vld [vmem:[#allocation2 + $0x2c0] sm:$0xff]
    %v142 = vld [vmem:[#allocation2 + $0x2c8] sm:$0xff]
    %v143 = vld [vmem:[#allocation2 + $0x2d0] sm:$0xff]
    %v144 = vld [vmem:[#allocation2 + $0x2d8] sm:$0xff]
    %v145 = vld [vmem:[#allocation2 + $0x2e0] sm:$0xff]
    %v146 = vld [vmem:[#allocation2 + $0x2e8] sm:$0xff]
    %v147 = vld [vmem:[#allocation2 + $0x2f0] sm:$0xff]
    %v148 = vld [vmem:[#allocation2 + $0x2f8] sm:$0xff]
    %v149 = vld [vmem:[#allocation2 + $0x300] sm:$0xff]
    %v150 = vld [vmem:[#allocation2 + $0x308] sm:$0xff]
    %v151 = vld [vmem:[%s2] sm:$0x3]
    %v153 = vlaneseq
    %v154 = vshrl.u32 %v153, 7
    %v155 = vsub.s32 0, %v154
    %v156 = vrot.slane %v151, %v155
    %v157 = vlaneseq
    %v158 = vshrl.u32 %v157, 7
    %v159 = vsub.s32 1, %v158
    %v160 = vrot.slane %v151, %v159
    %v167 = vunpack.c.l.b16 %v49
    %v168 = vunpack.c.h.b16 %v49
    %v169 = vunpack.c.l.b16 %v50
    %v170 = vunpack.c.h.b16 %v50
    %v171 = vunpack.c.l.b16 %v51
    %v172 = vunpack.c.h.b16 %v51
    %v173 = vunpack.c.l.b16 %v52
    %v174 = vpack.c.b16 %v167, %v167
    %v175 = vpack.c.b16 %v168, %v168
    %v176 = vpack.c.b16 %v169, %v169
    %v177 = vpack.c.b16 %v170, %v170
    %v178 = vpack.c.b16 %v171, %v171
    %v179 = vpack.c.b16 %v172, %v172
    %v180 = vpack.c.b16 %v173, %v173
    %v285 = vunpack.c.l.b16 %v53
    %v286 = vunpack.c.h.b16 %v53
    %v287 = vunpack.c.l.b16 %v54
    %v288 = vunpack.c.h.b16 %v54
    %v289 = vunpack.c.l.b16 %v55
    %v290 = vunpack.c.h.b16 %v55
    %v291 = vunpack.c.l.b16 %v56
    %v292 = vunpack.c.h.b16 %v56
    %v293 = vunpack.c.l.b16 %v57
    %v294 = vunpack.c.h.b16 %v57
    %v295 = vunpack.c.l.b16 %v58
    %v296 = vunpack.c.h.b16 %v58
    %v297 = vunpack.c.l.b16 %v59
    %v298 = vunpack.c.h.b16 %v59
    %v299 = vunpack.c.l.b16 %v60
    %v300 = vunpack.c.h.b16 %v60
    %v301 = vunpack.c.l.b16 %v61
    %v302 = vunpack.c.h.b16 %v61
    %v303 = vunpack.c.l.b16 %v62
    %v304 = vunpack.c.h.b16 %v62
    %v305 = vunpack.c.l.b16 %v63
    %v306 = vunpack.c.h.b16 %v63
    %v307 = vunpack.c.l.b16 %v64
    %v308 = vunpack.c.h.b16 %v64
    %v309 = vunpack.c.l.b16 %v65
    %v310 = vunpack.c.h.b16 %v65
    %v311 = vunpack.c.l.b16 %v66
    %v312 = vunpack.c.h.b16 %v66
    %v313 = vunpack.c.l.b16 %v67
    %v314 = vunpack.c.h.b16 %v67
    %v315 = vunpack.c.l.b16 %v68
    %v316 = vunpack.c.h.b16 %v68
    %v317 = vunpack.c.l.b16 %v69
    %v318 = vunpack.c.h.b16 %v69
    %v319 = vunpack.c.l.b16 %v70
    %v320 = vunpack.c.h.b16 %v70
    %v321 = vunpack.c.l.b16 %v71
    %v322 = vunpack.c.h.b16 %v71
    %v323 = vunpack.c.l.b16 %v72
    %v324 = vunpack.c.h.b16 %v72
    %v325 = vunpack.c.l.b16 %v73
    %v326 = vunpack.c.h.b16 %v73
    %v327 = vunpack.c.l.b16 %v74
    %v328 = vunpack.c.h.b16 %v74
    %v329 = vunpack.c.l.b16 %v75
    %v330 = vunpack.c.h.b16 %v75
    %v331 = vunpack.c.l.b16 %v76
    %v332 = vunpack.c.h.b16 %v76
    %v333 = vunpack.c.l.b16 %v77
    %v334 = vunpack.c.h.b16 %v77
    %v335 = vunpack.c.l.b16 %v78
    %v336 = vunpack.c.h.b16 %v78
    %v337 = vunpack.c.l.b16 %v79
    %v338 = vunpack.c.h.b16 %v79
    %v339 = vunpack.c.l.b16 %v80
    %v340 = vunpack.c.h.b16 %v80
    %v341 = vunpack.c.l.b16 %v81
    %v342 = vunpack.c.h.b16 %v81
    %v343 = vunpack.c.l.b16 %v82
    %v344 = vunpack.c.h.b16 %v82
    %v345 = vunpack.c.l.b16 %v83
    %v346 = vunpack.c.h.b16 %v83
    %v347 = vunpack.c.l.b16 %v84
    %v348 = vunpack.c.h.b16 %v84
    %v349 = vunpack.c.l.b16 %v85
    %v350 = vunpack.c.h.b16 %v85
    %v351 = vunpack.c.l.b16 %v86
    %v352 = vunpack.c.h.b16 %v86
    %v353 = vunpack.c.l.b16 %v87
    %v354 = vunpack.c.h.b16 %v87
    %v355 = vunpack.c.l.b16 %v88
    %v356 = vunpack.c.h.b16 %v88
    %v357 = vunpack.c.l.b16 %v89
    %v358 = vunpack.c.h.b16 %v89
    %v359 = vunpack.c.l.b16 %v90
    %v360 = vunpack.c.h.b16 %v90
    %v361 = vunpack.c.l.b16 %v91
    %v362 = vunpack.c.h.b16 %v91
    %v363 = vunpack.c.l.b16 %v92
    %v364 = vunpack.c.h.b16 %v92
    %v365 = vunpack.c.l.b16 %v93
    %v366 = vunpack.c.h.b16 %v93
    %v367 = vunpack.c.l.b16 %v94
    %v368 = vunpack.c.h.b16 %v94
    %v369 = vunpack.c.l.b16 %v95
    %v370 = vunpack.c.h.b16 %v95
    %v371 = vunpack.c.l.b16 %v96
    %v372 = vunpack.c.h.b16 %v96
    %v373 = vunpack.c.l.b16 %v97
    %v374 = vunpack.c.h.b16 %v97
    %v375 = vunpack.c.l.b16 %v98
    %v376 = vunpack.c.h.b16 %v98
    %v377 = vunpack.c.l.b16 %v99
    %v378 = vunpack.c.h.b16 %v99
    %v379 = vunpack.c.l.b16 %v100
    %v380 = vunpack.c.h.b16 %v100
    %v381 = vunpack.c.l.b16 %v101
    %v382 = vunpack.c.h.b16 %v101
    %v383 = vunpack.c.l.b16 %v102
    %v384 = vunpack.c.h.b16 %v102
    %v385 = vunpack.c.l.b16 %v103
    %v386 = vunpack.c.h.b16 %v103
    %v387 = vunpack.c.l.b16 %v104
    %v388 = vunpack.c.h.b16 %v104
    %v389 = vunpack.c.l.b16 %v105
    %v390 = vunpack.c.h.b16 %v105
    %v391 = vunpack.c.l.b16 %v106
    %v392 = vunpack.c.h.b16 %v106
    %v393 = vunpack.c.l.b16 %v107
    %v394 = vunpack.c.h.b16 %v107
    %v395 = vunpack.c.l.b16 %v108
    %v396 = vunpack.c.h.b16 %v108
    %v397 = vunpack.c.l.b16 %v109
    %v398 = vunpack.c.h.b16 %v109
    %v399 = vunpack.c.l.b16 %v110
    %v400 = vunpack.c.h.b16 %v110
    %v401 = vunpack.c.l.b16 %v111
    %v402 = vunpack.c.h.b16 %v111
    %v403 = vunpack.c.l.b16 %v112
    %v404 = vunpack.c.h.b16 %v112
    %v405 = vunpack.c.l.b16 %v113
    %v406 = vunpack.c.h.b16 %v113
    %v407 = vunpack.c.l.b16 %v114
    %v408 = vunpack.c.h.b16 %v114
    %v409 = vunpack.c.l.b16 %v115
    %v410 = vunpack.c.h.b16 %v115
    %v411 = vunpack.c.l.b16 %v116
    %v412 = vunpack.c.h.b16 %v116
    %v413 = vunpack.c.l.b16 %v117
    %v414 = vunpack.c.h.b16 %v117
    %v415 = vunpack.c.l.b16 %v118
    %v416 = vunpack.c.h.b16 %v118
    %v417 = vunpack.c.l.b16 %v119
    %v418 = vunpack.c.h.b16 %v119
    %v419 = vunpack.c.l.b16 %v120
    %v420 = vunpack.c.h.b16 %v120
    %v421 = vunpack.c.l.b16 %v121
    %v422 = vunpack.c.h.b16 %v121
    %v423 = vunpack.c.l.b16 %v122
    %v424 = vunpack.c.h.b16 %v122
    %v425 = vunpack.c.l.b16 %v123
    %v426 = vunpack.c.h.b16 %v123
    %v427 = vunpack.c.l.b16 %v124
    %v428 = vunpack.c.h.b16 %v124
    %v429 = vunpack.c.l.b16 %v125
    %v430 = vunpack.c.h.b16 %v125
    %v431 = vunpack.c.l.b16 %v126
    %v432 = vunpack.c.h.b16 %v126
    %v433 = vunpack.c.l.b16 %v127
    %v434 = vunpack.c.h.b16 %v127
    %v435 = vunpack.c.l.b16 %v128
    %v436 = vunpack.c.h.b16 %v128
    %v437 = vunpack.c.l.b16 %v129
    %v438 = vunpack.c.h.b16 %v129
    %v439 = vunpack.c.l.b16 %v130
    %v440 = vunpack.c.h.b16 %v130
    %v441 = vunpack.c.l.b16 %v131
    %v442 = vunpack.c.h.b16 %v131
    %v443 = vunpack.c.l.b16 %v132
    %v444 = vunpack.c.h.b16 %v132
    %v445 = vunpack.c.l.b16 %v133
    %v446 = vunpack.c.h.b16 %v133
    %v447 = vunpack.c.l.b16 %v134
    %v448 = vunpack.c.h.b16 %v134
    %v449 = vunpack.c.l.b16 %v135
    %v450 = vunpack.c.h.b16 %v135
    %v451 = vunpack.c.l.b16 %v136
    %v452 = vunpack.c.h.b16 %v136
    %v453 = vunpack.c.l.b16 %v137
    %v454 = vunpack.c.h.b16 %v137
    %v455 = vunpack.c.l.b16 %v138
    %v456 = vunpack.c.h.b16 %v138
    %v457 = vunpack.c.l.b16 %v139
    %v458 = vunpack.c.h.b16 %v139
    %v459 = vunpack.c.l.b16 %v140
    %v460 = vunpack.c.h.b16 %v140
    %v461 = vunpack.c.l.b16 %v141
    %v462 = vunpack.c.h.b16 %v141
    %v463 = vunpack.c.l.b16 %v142
    %v464 = vunpack.c.h.b16 %v142
    %v465 = vunpack.c.l.b16 %v143
    %v466 = vunpack.c.h.b16 %v143
    %v467 = vunpack.c.l.b16 %v144
    %v468 = vunpack.c.h.b16 %v144
    %v469 = vunpack.c.l.b16 %v145
    %v470 = vunpack.c.h.b16 %v145
    %v471 = vunpack.c.l.b16 %v146
    %v472 = vunpack.c.h.b16 %v146
    %v473 = vunpack.c.l.b16 %v147
    %v474 = vunpack.c.h.b16 %v147
    %v475 = vunpack.c.l.b16 %v148
    %v476 = vunpack.c.h.b16 %v148
    %v477 = vunpack.c.l.b16 %v149
    %v478 = vunpack.c.h.b16 %v149
    %v479 = vunpack.c.l.b16 %v150
    %v480 = vunpack.c.h.b16 %v150
    %v481 = vpack.c.b16 %v287, %v285
    %v482 = vpack.c.b16 %v288, %v286
    %v483 = vpack.c.b16 %v291, %v289
    %v484 = vpack.c.b16 %v292, %v290
    %v485 = vpack.c.b16 %v295, %v293
    %v486 = vpack.c.b16 %v296, %v294
    %v487 = vpack.c.b16 %v299, %v297
    %v488 = vpack.c.b16 %v300, %v298
    %v489 = vpack.c.b16 %v303, %v301
    %v490 = vpack.c.b16 %v304, %v302
    %v491 = vpack.c.b16 %v307, %v305
    %v492 = vpack.c.b16 %v308, %v306
    %v493 = vpack.c.b16 %v311, %v309
    %v494 = vpack.c.b16 %v312, %v310
    %v495 = vpack.c.b16 %v315, %v313
    %v496 = vpack.c.b16 %v316, %v314
    %v497 = vpack.c.b16 %v319, %v317
    %v498 = vpack.c.b16 %v320, %v318
    %v499 = vpack.c.b16 %v323, %v321
    %v500 = vpack.c.b16 %v324, %v322
    %v501 = vpack.c.b16 %v327, %v325
    %v502 = vpack.c.b16 %v328, %v326
    %v503 = vpack.c.b16 %v331, %v329
    %v504 = vpack.c.b16 %v332, %v330
    %v505 = vpack.c.b16 %v335, %v333
    %v506 = vpack.c.b16 %v336, %v334
    %v507 = vpack.c.b16 %v339, %v337
    %v508 = vpack.c.b16 %v340, %v338
    %v509 = vpack.c.b16 %v343, %v341
    %v510 = vpack.c.b16 %v344, %v342
    %v511 = vpack.c.b16 %v347, %v345
    %v512 = vpack.c.b16 %v348, %v346
    %v513 = vpack.c.b16 %v351, %v349
    %v514 = vpack.c.b16 %v352, %v350
    %v515 = vpack.c.b16 %v355, %v353
    %v516 = vpack.c.b16 %v356, %v354
    %v517 = vpack.c.b16 %v359, %v357
    %v518 = vpack.c.b16 %v360, %v358
    %v519 = vpack.c.b16 %v363, %v361
    %v520 = vpack.c.b16 %v364, %v362
    %v521 = vpack.c.b16 %v367, %v365
    %v522 = vpack.c.b16 %v368, %v366
    %v523 = vpack.c.b16 %v371, %v369
    %v524 = vpack.c.b16 %v372, %v370
    %v525 = vpack.c.b16 %v375, %v373
    %v526 = vpack.c.b16 %v376, %v374
    %v527 = vpack.c.b16 %v379, %v377
    %v528 = vpack.c.b16 %v380, %v378
    %v529 = vpack.c.b16 %v383, %v381
    %v530 = vpack.c.b16 %v384, %v382
    %v531 = vpack.c.b16 %v387, %v385
    %v532 = vpack.c.b16 %v388, %v386
    %v533 = vpack.c.b16 %v391, %v389
    %v534 = vpack.c.b16 %v392, %v390
    %v535 = vpack.c.b16 %v395, %v393
    %v536 = vpack.c.b16 %v396, %v394
    %v537 = vpack.c.b16 %v399, %v397
    %v538 = vpack.c.b16 %v400, %v398
    %v539 = vpack.c.b16 %v403, %v401
    %v540 = vpack.c.b16 %v404, %v402
    %v541 = vpack.c.b16 %v407, %v405
    %v542 = vpack.c.b16 %v408, %v406
    %v543 = vpack.c.b16 %v411, %v409
    %v544 = vpack.c.b16 %v412, %v410
    %v545 = vpack.c.b16 %v415, %v413
    %v546 = vpack.c.b16 %v416, %v414
    %v547 = vpack.c.b16 %v419, %v417
    %v548 = vpack.c.b16 %v420, %v418
    %v549 = vpack.c.b16 %v423, %v421
    %v550 = vpack.c.b16 %v424, %v422
    %v551 = vpack.c.b16 %v427, %v425
    %v552 = vpack.c.b16 %v428, %v426
    %v553 = vpack.c.b16 %v431, %v429
    %v554 = vpack.c.b16 %v432, %v430
    %v555 = vpack.c.b16 %v435, %v433
    %v556 = vpack.c.b16 %v436, %v434
    %v557 = vpack.c.b16 %v439, %v437
    %v558 = vpack.c.b16 %v440, %v438
    %v559 = vpack.c.b16 %v443, %v441
    %v560 = vpack.c.b16 %v444, %v442
    %v561 = vpack.c.b16 %v447, %v445
    %v562 = vpack.c.b16 %v448, %v446
    %v563 = vpack.c.b16 %v451, %v449
    %v564 = vpack.c.b16 %v452, %v450
    %v565 = vpack.c.b16 %v455, %v453
    %v566 = vpack.c.b16 %v456, %v454
    %v567 = vpack.c.b16 %v459, %v457
    %v568 = vpack.c.b16 %v460, %v458
    %v569 = vpack.c.b16 %v463, %v461
    %v570 = vpack.c.b16 %v464, %v462
    %v571 = vpack.c.b16 %v467, %v465
    %v572 = vpack.c.b16 %v468, %v466
    %v573 = vpack.c.b16 %v471, %v469
    %v574 = vpack.c.b16 %v472, %v470
    %v575 = vpack.c.b16 %v475, %v473
    %v576 = vpack.c.b16 %v476, %v474
    %v577 = vpack.c.b16 %v479, %v477
    %v578 = vpack.c.b16 %v480, %v478
    %vm677 = vcmask 130048
    %v679 = vsel %vm677, %v180, 0
    %681 = vmatprep.subr.bf16.mxu0 %v496
    %682 = vmatpush1.bf16.msra.mxu0 %v495
    %683 = vmatprep.subr.bf16.mxu0 %v494
    %684 = vmatpush1.bf16.msra.mxu0 %v493
    %685 = vmatprep.subr.bf16.mxu0 %v492
    %686 = vmatpush1.bf16.msra.mxu0 %v491
    %687 = vmatprep.subr.bf16.mxu0 %v490
    %688 = vmatpush1.bf16.msra.mxu0 %v489
    %689 = vmatprep.subr.bf16.mxu0 %v488
    %690 = vmatpush1.bf16.msra.mxu0 %v487
    %691 = vmatprep.subr.bf16.mxu0 %v486
    %692 = vmatpush1.bf16.msra.mxu0 %v485
    %693 = vmatprep.subr.bf16.mxu0 %v484
    %694 = vmatpush1.bf16.msra.mxu0 %v483
    %695 = vmatprep.subr.bf16.mxu0 %v482
    %696 = vmatpush1.bf16.msra.mxu0 %v481
    %697 = vmatprep.subr.bf16.mxu0 %v512
    %698 = vmatpush2.bf16.msra.mxu0 %v511
    %699 = vmatprep.subr.bf16.mxu0 %v510
    %700 = vmatpush2.bf16.msra.mxu0 %v509
    %701 = vmatprep.subr.bf16.mxu0 %v508
    %702 = vmatpush2.bf16.msra.mxu0 %v507
    %703 = vmatprep.subr.bf16.mxu0 %v506
    %704 = vmatpush2.bf16.msra.mxu0 %v505
    %705 = vmatprep.subr.bf16.mxu0 %v504
    %706 = vmatpush2.bf16.msra.mxu0 %v503
    %707 = vmatprep.subr.bf16.mxu0 %v502
    %708 = vmatpush2.bf16.msra.mxu0 %v501
    %709 = vmatprep.subr.bf16.mxu0 %v500
    %710 = vmatpush2.bf16.msra.mxu0 %v499
    %711 = vmatprep.subr.bf16.mxu0 %v498
    %712 = vmatpush2.bf16.msra.mxu0 %v497
    %713 = vmatprep.mubr.bf16.mxu0 %v175
    %714 = vmatmul.mubr.bf16.gmra.mxu0 %v174
    %v715 = vpop.f32.mrf.mxu0
    %v716 = vadd.f32 %v156, %v715
    %v717 = vpop.f32.mrf.mxu0
    %v718 = vadd.f32 %v160, %v717
    %v719 = vpop.f32.mrf.mxu0
    %v720 = vpop.f32.mrf.mxu0
    %721 = vdwg.mxu0
    %722 = vmatprep.subr.bf16.mxu0 %v528
    %723 = vmatpush1.bf16.msra.mxu0 %v527
    %724 = vmatprep.subr.bf16.mxu0 %v526
    %725 = vmatpush1.bf16.msra.mxu0 %v525
    %726 = vmatprep.subr.bf16.mxu0 %v524
    %727 = vmatpush1.bf16.msra.mxu0 %v523
    %728 = vmatprep.subr.bf16.mxu0 %v522
    %729 = vmatpush1.bf16.msra.mxu0 %v521
    %730 = vmatprep.subr.bf16.mxu0 %v520
    %731 = vmatpush1.bf16.msra.mxu0 %v519
    %732 = vmatprep.subr.bf16.mxu0 %v518
    %733 = vmatpush1.bf16.msra.mxu0 %v517
    %734 = vmatprep.subr.bf16.mxu0 %v516
    %735 = vmatpush1.bf16.msra.mxu0 %v515
    %736 = vmatprep.subr.bf16.mxu0 %v514
    %737 = vmatpush1.bf16.msra.mxu0 %v513
    %738 = vmatprep.subr.bf16.mxu0 %v544
    %739 = vmatpush2.bf16.msra.mxu0 %v543
    %740 = vmatprep.subr.bf16.mxu0 %v542
    %741 = vmatpush2.bf16.msra.mxu0 %v541
    %742 = vmatprep.subr.bf16.mxu0 %v540
    %743 = vmatpush2.bf16.msra.mxu0 %v539
    %744 = vmatprep.subr.bf16.mxu0 %v538
    %745 = vmatpush2.bf16.msra.mxu0 %v537
    %746 = vmatprep.subr.bf16.mxu0 %v536
    %747 = vmatpush2.bf16.msra.mxu0 %v535
    %748 = vmatprep.subr.bf16.mxu0 %v534
    %749 = vmatpush2.bf16.msra.mxu0 %v533
    %750 = vmatprep.subr.bf16.mxu0 %v532
    %751 = vmatpush2.bf16.msra.mxu0 %v531
    %752 = vmatprep.subr.bf16.mxu0 %v530
    %753 = vmatpush2.bf16.msra.mxu0 %v529
    %754 = vmatprep.mubr.bf16.mxu0 %v177
    %755 = vmatmul.mubr.bf16.gmra.mxu0 %v176
    %v756 = vpop.f32.mrf.mxu0
    %v757 = vadd.f32 %v716, %v756
    %v758 = vpop.f32.mrf.mxu0
    %v759 = vadd.f32 %v718, %v758
    %v760 = vpop.f32.mrf.mxu0
    %v761 = vpop.f32.mrf.mxu0
    %762 = vdwg.mxu0
    %763 = vmatprep.subr.bf16.mxu0 %v560
    %764 = vmatpush1.bf16.msra.mxu0 %v559
    %765 = vmatprep.subr.bf16.mxu0 %v558
    %766 = vmatpush1.bf16.msra.mxu0 %v557
    %767 = vmatprep.subr.bf16.mxu0 %v556
    %768 = vmatpush1.bf16.msra.mxu0 %v555
    %769 = vmatprep.subr.bf16.mxu0 %v554
    %770 = vmatpush1.bf16.msra.mxu0 %v553
    %771 = vmatprep.subr.bf16.mxu0 %v552
    %772 = vmatpush1.bf16.msra.mxu0 %v551
    %773 = vmatprep.subr.bf16.mxu0 %v550
    %774 = vmatpush1.bf16.msra.mxu0 %v549
    %775 = vmatprep.subr.bf16.mxu0 %v548
    %776 = vmatpush1.bf16.msra.mxu0 %v547
    %777 = vmatprep.subr.bf16.mxu0 %v546
    %778 = vmatpush1.bf16.msra.mxu0 %v545
    %779 = vmatprep.subr.bf16.mxu0 %v576
    %780 = vmatpush2.bf16.msra.mxu0 %v575
    %781 = vmatprep.subr.bf16.mxu0 %v574
    %782 = vmatpush2.bf16.msra.mxu0 %v573
    %783 = vmatprep.subr.bf16.mxu0 %v572
    %784 = vmatpush2.bf16.msra.mxu0 %v571
    %785 = vmatprep.subr.bf16.mxu0 %v570
    %786 = vmatpush2.bf16.msra.mxu0 %v569
    %787 = vmatprep.subr.bf16.mxu0 %v568
    %788 = vmatpush2.bf16.msra.mxu0 %v567
    %789 = vmatprep.subr.bf16.mxu0 %v566
    %790 = vmatpush2.bf16.msra.mxu0 %v565
    %791 = vmatprep.subr.bf16.mxu0 %v564
    %792 = vmatpush2.bf16.msra.mxu0 %v563
    %793 = vmatprep.subr.bf16.mxu0 %v562
    %794 = vmatpush2.bf16.msra.mxu0 %v561
    %795 = vmatprep.mubr.bf16.mxu0 %v179
    %796 = vmatmul.mubr.bf16.gmra.mxu0 %v178
    %v797 = vpop.f32.mrf.mxu0
    %v798 = vadd.f32 %v757, %v797
    %v799 = vpop.f32.mrf.mxu0
    %v800 = vadd.f32 %v759, %v799
    %v801 = vpop.f32.mrf.mxu0
    %v802 = vpop.f32.mrf.mxu0
    %803 = vdwg.mxu0
    %804 = vmatprep.subr.bf16.mxu0 0
    %805 = vmatpush1.bf16.msra.mxu0 0
    %806 = vmatprep.subr.bf16.mxu0 0
    %807 = vmatpush1.bf16.msra.mxu0 0
    %808 = vmatprep.subr.bf16.mxu0 0
    %809 = vmatpush1.bf16.msra.mxu0 0
    %810 = vmatprep.subr.bf16.mxu0 0
    %811 = vmatpush1.bf16.msra.mxu0 0
    %812 = vmatprep.subr.bf16.mxu0 0
    %813 = vmatpush1.bf16.msra.mxu0 0
    %814 = vmatprep.subr.bf16.mxu0 0
    %815 = vmatpush1.bf16.msra.mxu0 0
    %816 = vmatprep.subr.bf16.mxu0 0
    %817 = vmatpush1.bf16.msra.mxu0 0
    %818 = vmatprep.subr.bf16.mxu0 %v578
    %819 = vmatpush1.bf16.msra.mxu0 %v577
    %820 = vmatprep.subr.bf16.mxu0 0
    %821 = vmatpush2.bf16.msra.mxu0 0
    %822 = vmatprep.subr.bf16.mxu0 0
    %823 = vmatpush2.bf16.msra.mxu0 0
    %824 = vmatprep.subr.bf16.mxu0 0
    %825 = vmatpush2.bf16.msra.mxu0 0
    %826 = vmatprep.subr.bf16.mxu0 0
    %827 = vmatpush2.bf16.msra.mxu0 0
    %828 = vmatprep.subr.bf16.mxu0 0
    %829 = vmatpush2.bf16.msra.mxu0 0
    %830 = vmatprep.subr.bf16.mxu0 0
    %831 = vmatpush2.bf16.msra.mxu0 0
    %832 = vmatprep.subr.bf16.mxu0 0
    %833 = vmatpush2.bf16.msra.mxu0 0
    %834 = vmatprep.subr.bf16.mxu0 0
    %835 = vmatpush2.bf16.msra.mxu0 0
    %836 = vmatprep.mubr.bf16.mxu0 0
    %837 = vmatmul.mubr.bf16.gmra.mxu0 %v679
    %v838 = vpop.f32.mrf.mxu0
    %v839 = vadd.f32 %v798, %v838
    %v840 = vpop.f32.mrf.mxu0
    %v841 = vadd.f32 %v800, %v840
    %v842 = vpop.f32.mrf.mxu0
    %v843 = vpop.f32.mrf.mxu0
    %844 = vdwg.mxu0
    %v845 = vmax.f32 %v839, 0.0
    %v846 = vmax.f32 %v841, 0.0
    %v847 = vpack.c.bf16 %v845, %v845
    %v848 = vpack.c.bf16 %v846, %v846
    %v849 = vld [vmem:[#allocation4] sm:$0xf]
    %v850 = vld [vmem:[#allocation4 + $0x4] sm:$0xf]
    %v851 = vld [vmem:[#allocation4 + $0x8] sm:$0xf]
    %v852 = vld [vmem:[#allocation4 + $0xc] sm:$0xf]
    %v853 = vld [vmem:[#allocation4 + $0x10] sm:$0xf]
    %v854 = vld [vmem:[#allocation4 + $0x14] sm:$0xf]
    %v855 = vld [vmem:[#allocation4 + $0x18] sm:$0xf]
    %v856 = vld [vmem:[#allocation4 + $0x1c] sm:$0xf]
    %v857 = vld [vmem:[#allocation4 + $0x20] sm:$0xf]
    %v858 = vld [vmem:[#allocation4 + $0x24] sm:$0xf]
    %v859 = vld [vmem:[#allocation4 + $0x28] sm:$0xf]
    %v860 = vld [vmem:[#allocation4 + $0x2c] sm:$0xf]
    %v861 = vld [vmem:[#allocation4 + $0x30] sm:$0xf]
    %v862 = vld [vmem:[#allocation4 + $0x34] sm:$0xf]
    %v863 = vld [vmem:[#allocation4 + $0x38] sm:$0xf]
    %v864 = vld [vmem:[#allocation4 + $0x3c] sm:$0xf]
    %v865 = vld [vmem:[#allocation4 + $0x40] sm:$0xf]
    %v866 = vld [vmem:[#allocation4 + $0x44] sm:$0xf]
    %v867 = vld [vmem:[#allocation4 + $0x48] sm:$0xf]
    %v868 = vld [vmem:[#allocation4 + $0x4c] sm:$0xf]
    %v869 = vld [vmem:[#allocation4 + $0x50] sm:$0xf]
    %v870 = vld [vmem:[#allocation4 + $0x54] sm:$0xf]
    %v871 = vld [vmem:[#allocation4 + $0x58] sm:$0xf]
    %v872 = vld [vmem:[#allocation4 + $0x5c] sm:$0xf]
    %v873 = vld [vmem:[#allocation4 + $0x60] sm:$0xf]
    %v874 = vld [vmem:[#allocation4 + $0x64] sm:$0xf]
    %v875 = vld [vmem:[#allocation4 + $0x68] sm:$0xf]
    %v876 = vld [vmem:[#allocation4 + $0x6c] sm:$0xf]
    %v877 = vld [vmem:[#allocation4 + $0x70] sm:$0xf]
    %v878 = vld [vmem:[#allocation4 + $0x74] sm:$0xf]
    %v879 = vld [vmem:[#allocation4 + $0x78] sm:$0xf]
    %v880 = vld [vmem:[#allocation4 + $0x7c] sm:$0xf]
    %v881 = vld [vmem:[%s4] sm:$0x1]
    %v883 = vlaneseq
    %v884 = vshrl.u32 %v883, 7
    %v885 = vsub.s32 0, %v884
    %v886 = vrot.slane %v881, %v885
    %v920 = vunpack.c.l.b16 %v849
    %v921 = vunpack.c.l.b16 %v850
    %v922 = vunpack.c.l.b16 %v851
    %v923 = vunpack.c.l.b16 %v852
    %v924 = vunpack.c.l.b16 %v853
    %v925 = vunpack.c.l.b16 %v854
    %v926 = vunpack.c.l.b16 %v855
    %v927 = vunpack.c.l.b16 %v856
    %v928 = vunpack.c.l.b16 %v857
    %v929 = vunpack.c.l.b16 %v858
    %v930 = vunpack.c.l.b16 %v859
    %v931 = vunpack.c.l.b16 %v860
    %v932 = vunpack.c.l.b16 %v861
    %v933 = vunpack.c.l.b16 %v862
    %v934 = vunpack.c.l.b16 %v863
    %v935 = vunpack.c.l.b16 %v864
    %v936 = vunpack.c.l.b16 %v865
    %v937 = vunpack.c.l.b16 %v866
    %v938 = vunpack.c.l.b16 %v867
    %v939 = vunpack.c.l.b16 %v868
    %v940 = vunpack.c.l.b16 %v869
    %v941 = vunpack.c.l.b16 %v870
    %v942 = vunpack.c.l.b16 %v871
    %v943 = vunpack.c.l.b16 %v872
    %v944 = vunpack.c.l.b16 %v873
    %v945 = vunpack.c.l.b16 %v874
    %v946 = vunpack.c.l.b16 %v875
    %v947 = vunpack.c.l.b16 %v876
    %v948 = vunpack.c.l.b16 %v877
    %v949 = vunpack.c.l.b16 %v878
    %v950 = vunpack.c.l.b16 %v879
    %v951 = vunpack.c.l.b16 %v880
    %v952 = vpack.c.b16 %v921, %v920
    %v953 = vpack.c.b16 %v923, %v922
    %v954 = vpack.c.b16 %v925, %v924
    %v955 = vpack.c.b16 %v927, %v926
    %v956 = vpack.c.b16 %v929, %v928
    %v957 = vpack.c.b16 %v931, %v930
    %v958 = vpack.c.b16 %v933, %v932
    %v959 = vpack.c.b16 %v935, %v934
    %v960 = vpack.c.b16 %v937, %v936
    %v961 = vpack.c.b16 %v939, %v938
    %v962 = vpack.c.b16 %v941, %v940
    %v963 = vpack.c.b16 %v943, %v942
    %v964 = vpack.c.b16 %v945, %v944
    %v965 = vpack.c.b16 %v947, %v946
    %v966 = vpack.c.b16 %v949, %v948
    %v967 = vpack.c.b16 %v951, %v950
    %984 = vmatprep.subr.bf16.mxu0 0
    %985 = vmatpush1.bf16.msra.mxu0 %v959
    %986 = vmatprep.subr.bf16.mxu0 0
    %987 = vmatpush1.bf16.msra.mxu0 %v958
    %988 = vmatprep.subr.bf16.mxu0 0
    %989 = vmatpush1.bf16.msra.mxu0 %v957
    %990 = vmatprep.subr.bf16.mxu0 0
    %991 = vmatpush1.bf16.msra.mxu0 %v956
    %992 = vmatprep.subr.bf16.mxu0 0
    %993 = vmatpush1.bf16.msra.mxu0 %v955
    %994 = vmatprep.subr.bf16.mxu0 0
    %995 = vmatpush1.bf16.msra.mxu0 %v954
    %996 = vmatprep.subr.bf16.mxu0 0
    %997 = vmatpush1.bf16.msra.mxu0 %v953
    %998 = vmatprep.subr.bf16.mxu0 0
    %999 = vmatpush1.bf16.msra.mxu0 %v952
    %1000 = vmatprep.subr.bf16.mxu0 0
    %1001 = vmatpush2.bf16.msra.mxu0 %v967
    %1002 = vmatprep.subr.bf16.mxu0 0
    %1003 = vmatpush2.bf16.msra.mxu0 %v966
    %1004 = vmatprep.subr.bf16.mxu0 0
    %1005 = vmatpush2.bf16.msra.mxu0 %v965
    %1006 = vmatprep.subr.bf16.mxu0 0
    %1007 = vmatpush2.bf16.msra.mxu0 %v964
    %1008 = vmatprep.subr.bf16.mxu0 0
    %1009 = vmatpush2.bf16.msra.mxu0 %v963
    %1010 = vmatprep.subr.bf16.mxu0 0
    %1011 = vmatpush2.bf16.msra.mxu0 %v962
    %1012 = vmatprep.subr.bf16.mxu0 0
    %1013 = vmatpush2.bf16.msra.mxu0 %v961
    %1014 = vmatprep.subr.bf16.mxu0 0
    %1015 = vmatpush2.bf16.msra.mxu0 %v960
    %1016 = vmatprep.mubr.bf16.mxu0 %v848
    %1017 = vmatmul.mubr.bf16.gmra.mxu0 %v847
    %v1018 = vpop.f32.mrf.mxu0
    %v1019 = vadd.f32 %v886, %v1018
    %v1020 = vpop.f32.mrf.mxu0
    %v1021 = vpop.f32.mrf.mxu0
    %v1022 = vpop.f32.mrf.mxu0
    %1023 = vdwg.mxu0
    %1024 = vst [vmem:[%s5] sm:$0xff] %v1019
    // Predicated region
    $region30: #{encoder_forward.1} parent=1 // pred_check
      _
    $region31: #{encoder_forward.1} parent=1 // pred_check_branch
      %1026 = sbr.rel (0) target = $region33
    $region32: #{encoder_forward.1} parent=1 // pred_region
      _
    $region33: #{encoder_forward.1} parent=1 // pred_fallthru
      _
    // Predicated region
    $region34: #{encoder_forward.1} parent=1 // pred_check
      _
    $region35: #{encoder_forward.1} parent=1 // pred_check_branch
      %1028 = sbr.rel (0) target = $region37
    $region36: #{encoder_forward.1} parent=1 // pred_region
      _
    $region37: #{encoder_forward.1} parent=1 // pred_fallthru
      _
    %1029 = vsyncpa [#allocation3], 1
    %1030 = vsyncpa [#allocation5], 1

</llo_original>
